<compile_context>
chip_gen: v7x
topology: tpu7x:2x2x1
jax: 0.10.0
libtpu: 0.0.40
codegen_flags: <defaults>
</compile_context>

<pallas_src>
import jax
import jax.numpy as jnp
from jax import lax
from jax.experimental import pallas as pl
from jax.experimental.pallas import tpu as pltpu


def _dot_t(x, w):
    """y = x @ w.T with w kept in nn.Linear (out, in) layout; f32 accumulation."""
    return lax.dot_general(
        x, w,
        dimension_numbers=(((1,), (1,)), ((), ())),
        preferred_element_type=jnp.float32)


def _layer_kernel(x_ref, attn_ref, wv_ref, vw_ref, vb_ref, ww_ref, wb_ref,
                  o_ref, acc_ref, res1_ref):
    # Grid = (seq_tiles [parallel], d_forward_tiles [arbitrary]).
    #   x_ref:    (S, B*d_model) f32   -- full X, resident across the grid
    #   attn_ref: (B, ts, S)     f32   -- attention rows for this seq tile
    #   wv_ref:   (d_model, d_model)   -- bf16, resident (nn.Linear (out,in))
    #   vw_ref:   (tk, d_model)        -- bf16, streamed over k
    #   vb_ref:   (1, tk)        f32   -- streamed over k
    #   ww_ref:   (d_model, tk)        -- bf16, streamed over k
    #   wb_ref:   (1, B*d_model) f32   -- resident, epilogue only
    #   o_ref:    (ts, B*d_model) f32  -- written at the last k only
    #   acc_ref:  (ts, B*d_model) f32  -- FFN accumulator scratch
    #   res1_ref: (ts, B*d_model) f32  -- residual scratch (built at k == 0)
    i = pl.program_id(0)
    k = pl.program_id(1)
    nk = pl.num_programs(1)

    B = attn_ref.shape[0]
    d_model = wv_ref.shape[1]
    ts = o_ref.shape[0]
    tk = vb_ref.shape[1]

    # ---- k == 0: zero the accumulator and build res1 = X + attention -------
    @pl.when(k == 0)
    def _():
        acc_ref[...] = jnp.zeros_like(acc_ref)
        row0 = pl.multiple_of(i * ts, ts)
        x_tile = x_ref[pl.ds(row0, ts), :]                    # (ts, B*d_model)
        wv = wv_ref[...]                                      # bf16 as passed
        # Attention mixes the whole sequence, so V uses the full X block.
        # B is tiny and static -> unrolled per-batch 2-D MXU dots.
        # TODO(synk): at realistic d_model (>=128 lanes) these per-batch lane
        # slices are vreg-aligned; at d_model=32 they are masked sub-vreg views.
        for b in range(B):
            lo = b * d_model
            x_b = x_ref[:, lo:lo + d_model]                   # (S, d_model) f32
            v_b = _dot_t(x_b.astype(jnp.bfloat16), wv)        # (S, d_model) f32
            att = jnp.dot(attn_ref[b].astype(jnp.bfloat16),
                          v_b.astype(jnp.bfloat16),
                          preferred_element_type=jnp.float32)  # (ts, d_model)
            res1_ref[:, lo:lo + d_model] = x_tile[:, lo:lo + d_model] + att

    # ---- every k: streamed FFN weight tiles -> accumulate ff into acc ------
    vw_k = vw_ref[...]                                        # (tk, d_model) bf16
    ww_k = ww_ref[...]                                        # (d_model, tk) bf16
    vb_bc = jnp.broadcast_to(vb_ref[...], (ts, tk))           # hoisted broadcast
    for b in range(B):
        lo = b * d_model
        r_b = res1_ref[:, lo:lo + d_model].astype(jnp.bfloat16)   # (ts, d_model)
        h = jnp.maximum(_dot_t(r_b, vw_k) + vb_bc, 0.0)       # (ts, tk) f32
        acc_ref[:, lo:lo + d_model] += _dot_t(h.astype(jnp.bfloat16), ww_k)

    # ---- last k: finalize out = res1 + ff (W bias added once, epilogue) ----
    @pl.when(k == nk - 1)
    def _():
        o_ref[...] = (res1_ref[...] + acc_ref[...] + wb_ref[...]).astype(o_ref.dtype)


@jax.jit
def manual_transformer_layer(X, attn_wts, params):
    """X: (S, B, d_model) f32, attn_wts: (B, S, S) f32 -> (S, B, d_model) f32.

    params: wv_w / v_w / w_w already bf16 (persistent copies, nn.Linear
    (out, in) layout); v_b / w_b f32.
    """
    S, B, d_model = X.shape
    d_forward = params["v_w"].shape[0]

    # Contiguity-preserving reshapes only (free): no HBM transposes.
    x_packed = X.reshape(S, B * d_model)
    v_bias = params["v_b"].reshape(1, d_forward)
    # W bias tiled over the packed batch lanes (tiny; added in the epilogue).
    w_bias = jnp.tile(params["w_b"], B).reshape(1, B * d_model)

    # Tile sizes: multiples of (8, 128) (or full extents) per the TPU layout
    # rules; at realistic sizes ts=256 / tk=512 feed the 2x256 MXU.
    ts = S if S <= 256 else 256
    tk = d_forward if d_forward <= 512 else 512
    assert S % ts == 0 and d_forward % tk == 0
    grid = (S // ts, d_forward // tk)

    flops = 2 * B * S * (d_model * d_model + S * d_model + 2 * d_model * d_forward)
    bytes_accessed = (
        4 * (2 * S * B * d_model + B * S * S + d_forward + B * d_model)  # f32 I/O
        + 2 * (d_model * d_model + 2 * d_model * d_forward))             # bf16 weights

    grid_spec = pltpu.PrefetchScalarGridSpec(
        num_scalar_prefetch=0,
        grid=grid,
        in_specs=[
            # Full X, resident (V needs the whole sequence).
            pl.BlockSpec((S, B * d_model), lambda i, k: (0, 0)),
            # Attention rows for this seq tile.
            pl.BlockSpec((B, ts, S), lambda i, k: (0, i, 0)),
            # Resident bf16 WV weight.
            pl.BlockSpec((d_model, d_model), lambda i, k: (0, 0)),
            # Streamed FFN weight / bias tiles along d_forward (the k axis).
            pl.BlockSpec((tk, d_model), lambda i, k: (k, 0)),
            pl.BlockSpec((1, tk), lambda i, k: (0, k)),
            pl.BlockSpec((d_model, tk), lambda i, k: (0, k)),
            # Resident packed W bias.
            pl.BlockSpec((1, B * d_model), lambda i, k: (0, 0)),
        ],
        out_specs=pl.BlockSpec((ts, B * d_model), lambda i, k: (i, 0)),
        scratch_shapes=[
            pltpu.VMEM((ts, B * d_model), jnp.float32),   # FFN accumulator
            pltpu.VMEM((ts, B * d_model), jnp.float32),   # res1
        ],
    )

    out_packed = pl.pallas_call(
        _layer_kernel,
        out_shape=jax.ShapeDtypeStruct((S, B * d_model), jnp.float32),
        grid_spec=grid_spec,
        compiler_params=pltpu.CompilerParams(
            dimension_semantics=("parallel", "arbitrary"),
            vmem_limit_bytes=32 * 1024 * 1024),
        cost_estimate=pl.CostEstimate(
            flops=flops, transcendentals=0, bytes_accessed=bytes_accessed),
    )(x_packed, attn_wts, params["wv_w"], params["v_w"], v_bias,
      params["w_w"], w_bias)

    return out_packed.reshape(S, B, d_model)


def _reference(X, attn_wts, params_f32):
    v = X @ params_f32["wv_w"].T                               # (S, B, d_model)
    att = jnp.einsum("bqk,kbd->qbd", attn_wts, v)              # (S, B, d_model)
    res1 = X + att
    h = jnp.maximum(res1 @ params_f32["v_w"].T + params_f32["v_b"], 0.0)
    ff = h @ params_f32["w_w"].T + params_f32["w_b"]
    return res1 + ff


if __name__ == "__main__":
    S, B, d_model, d_forward = 8, 2, 32, 64

    key = jax.random.PRNGKey(0)
    ks = jax.random.split(key, 7)
    # nn.Linear weight layout: (out_features, in_features)
    params_f32 = {
        "wv_w": jax.random.normal(ks[0], (d_model, d_model), jnp.float32) * 0.1,
        "v_w":  jax.random.normal(ks[1], (d_forward, d_model), jnp.float32) * 0.1,
        "v_b":  jax.random.normal(ks[2], (d_forward,), jnp.float32) * 0.1,
        "w_w":  jax.random.normal(ks[3], (d_model, d_forward), jnp.float32) * 0.1,
        "w_b":  jax.random.normal(ks[4], (d_model,), jnp.float32) * 0.1,
    }
    # Persistent bf16 weight copies (cast once, outside the jitted call).
    kernel_params = {
        "wv_w": params_f32["wv_w"].astype(jnp.bfloat16),
        "v_w":  params_f32["v_w"].astype(jnp.bfloat16),
        "w_w":  params_f32["w_w"].astype(jnp.bfloat16),
        "v_b":  params_f32["v_b"],
        "w_b":  params_f32["w_b"],
    }

    X = jax.random.normal(ks[5], (S, B, d_model), jnp.float32)
    attn_logits = jax.random.normal(ks[6], (B, S, S), jnp.float32)
    attn_wts = jax.nn.softmax(attn_logits, axis=-1)

    out = jax.block_until_ready(manual_transformer_layer(X, attn_wts, kernel_params))
    ref = _reference(X, attn_wts, params_f32)

    assert out.shape == (S, B, d_model)
    # bf16 MXU operands (f32 accumulation) -> relaxed tolerance vs f32 reference.
    assert jnp.allclose(out, ref, atol=5e-2, rtol=5e-2), \
        float(jnp.max(jnp.abs(out - ref)))

    print("KERNEL_OK")
</pallas_src>

<mosaic_0001>
module attributes {stable_mosaic.version = 11 : i64} {
  func.func @_layer_kernel(%arg0: i32, %arg1: i32, %arg2: memref<8x64xf32, #tpu.memory_space<vmem>>, %arg3: memref<2x8x8xf32, #tpu.memory_space<vmem>>, %arg4: memref<32x32xbf16, #tpu.memory_space<vmem>>, %arg5: memref<64x32xbf16, #tpu.memory_space<vmem>>, %arg6: memref<1x64xf32, #tpu.memory_space<vmem>>, %arg7: memref<32x64xbf16, #tpu.memory_space<vmem>>, %arg8: memref<1x64xf32, #tpu.memory_space<vmem>>, %arg9: memref<8x64xf32, #tpu.memory_space<vmem>>, %arg10: memref<8x64xf32, #tpu.memory_space<vmem>>, %arg11: memref<8x64xf32, #tpu.memory_space<vmem>>) attributes {dimension_semantics = [#tpu.dimension_semantics<parallel>, #tpu.dimension_semantics<arbitrary>], iteration_bounds = array<i64: 1, 1>, scalar_prefetch = 0 : i64, scratch_operands = 2 : i64, tpu.core_type = #tpu.core_type<tc>, window_params = [{pipeline_mode = #tpu.pipeline_mode<synchronous>, transform_indices = @transform_0, window_bounds = array<i64: 8, 64>}, {transform_indices = @transform_1, window_bounds = array<i64: 2, 8, 8>}, {pipeline_mode = #tpu.pipeline_mode<synchronous>, transform_indices = @transform_2, window_bounds = array<i64: 32, 32>}, {transform_indices = @transform_3, window_bounds = array<i64: 64, 32>}, {transform_indices = @transform_4, window_bounds = array<i64: 1, 64>}, {transform_indices = @transform_5, window_bounds = array<i64: 32, 64>}, {pipeline_mode = #tpu.pipeline_mode<synchronous>, transform_indices = @transform_6, window_bounds = array<i64: 1, 64>}, {transform_indices = @transform_7, window_bounds = array<i64: 8, 64>}]} {
    %c0_i32 = arith.constant 0 : i32
    %0 = arith.cmpi eq, %arg1, %c0_i32 : i32
    %1 = arith.extui %0 : i1 to i32
    %c0_i32_0 = arith.constant 0 : i32
    %2 = arith.cmpi ne, %1, %c0_i32_0 : i32
    scf.if %2 {
      %cst_24 = arith.constant 0.000000e+00 : f32
      %33 = vector.broadcast %cst_24 : f32 to vector<8x64xf32>
      %c0_25 = arith.constant 0 : index
      %c0_26 = arith.constant 0 : index
      %34 = vector.load %arg10[%c0_25, %c0_26] : memref<8x64xf32, #tpu.memory_space<vmem>>, vector<8x64xf32>
      tpu.vector_store %arg10[%c0_25, %c0_26], %33 {strides = array<i32>} : memref<8x64xf32, #tpu.memory_space<vmem>>, vector<8x64xf32>,
      %c8_i32 = arith.constant 8 : i32
      %35 = arith.muli %arg0, %c8_i32 : i32
      %36 = tpu.assume_multiple %35, 8 : i32
      %37 = arith.index_cast %36 : i32 to index
      %c0_27 = arith.constant 0 : index
      %38 = vector.load %arg2[%37, %c0_27] : memref<8x64xf32, #tpu.memory_space<vmem>>, vector<8x64xf32>
      %c0_28 = arith.constant 0 : index
      %c0_29 = arith.constant 0 : index
      %39 = vector.load %arg4[%c0_28, %c0_29] : memref<32x32xbf16, #tpu.memory_space<vmem>>, vector<32x32xbf16>
      %c0_30 = arith.constant 0 : index
      %c0_31 = arith.constant 0 : index
      %40 = vector.load %arg2[%c0_30, %c0_31] : memref<8x64xf32, #tpu.memory_space<vmem>>, vector<8x32xf32>
      %41 = arith.truncf %40 : vector<8x32xf32> to vector<8x32xbf16>
      %cst_32 = arith.constant dense<0.000000e+00> : vector<8x32xf32>
      %42 = tpu.matmul %41, %39, %cst_32 {dimension_numbers = #tpu.dot_dimension_numbers<[1], [1], [0], [0], [0, 0, 1, 0], [], []>} : vector<8x32xbf16>, vector<32x32xbf16>, vector<8x32xf32> -> vector<8x32xf32>
      %c0_33 = arith.constant 0 : index
      %c0_34 = arith.constant 0 : index
      %c0_35 = arith.constant 0 : index
      %43 = vector.load %arg3[%c0_33, %c0_34, %c0_35] : memref<2x8x8xf32, #tpu.memory_space<vmem>>, vector<1x8x8xf32>
      %44 = vector.shape_cast %43 : vector<1x8x8xf32> to vector<8x8xf32>
      %45 = arith.truncf %44 : vector<8x8xf32> to vector<8x8xbf16>
      %46 = arith.truncf %42 : vector<8x32xf32> to vector<8x32xbf16>
      %cst_36 = arith.constant dense<0.000000e+00> : vector<8x32xf32>
      %47 = tpu.matmul %45, %46, %cst_36 {dimension_numbers = #tpu.dot_dimension_numbers<[1], [0], [0], [1], [0, 0, 1, 1], [], []>} : vector<8x8xbf16>, vector<8x32xbf16>, vector<8x32xf32> -> vector<8x32xf32>
      %48 = vector.extract_strided_slice %38 {offsets = [0, 0], sizes = [8, 32], strides = [1, 1]} : vector<8x64xf32> to vector<8x32xf32>
      %49 = arith.addf %48, %47 : vector<8x32xf32>
      %c0_37 = arith.constant 0 : index
      %c0_38 = arith.constant 0 : index
      %50 = vector.load %arg11[%c0_37, %c0_38] : memref<8x64xf32, #tpu.memory_space<vmem>>, vector<8x32xf32>
      tpu.vector_store %arg11[%c0_37, %c0_38], %49 {strides = array<i32>} : memref<8x64xf32, #tpu.memory_space<vmem>>, vector<8x32xf32>,
      %c0_39 = arith.constant 0 : index
      %c32_40 = arith.constant 32 : index
      %51 = vector.load %arg2[%c0_39, %c32_40] : memref<8x64xf32, #tpu.memory_space<vmem>>, vector<8x32xf32>
      %52 = arith.truncf %51 : vector<8x32xf32> to vector<8x32xbf16>
      %cst_41 = arith.constant dense<0.000000e+00> : vector<8x32xf32>
      %53 = tpu.matmul %52, %39, %cst_41 {dimension_numbers = #tpu.dot_dimension_numbers<[1], [1], [0], [0], [0, 0, 1, 0], [], []>} : vector<8x32xbf16>, vector<32x32xbf16>, vector<8x32xf32> -> vector<8x32xf32>
      %c1 = arith.constant 1 : index
      %c0_42 = arith.constant 0 : index
      %c0_43 = arith.constant 0 : index
      %54 = vector.load %arg3[%c1, %c0_42, %c0_43] : memref<2x8x8xf32, #tpu.memory_space<vmem>>, vector<1x8x8xf32>
      %55 = vector.shape_cast %54 : vector<1x8x8xf32> to vector<8x8xf32>
      %56 = arith.truncf %55 : vector<8x8xf32> to vector<8x8xbf16>
      %57 = arith.truncf %53 : vector<8x32xf32> to vector<8x32xbf16>
      %cst_44 = arith.constant dense<0.000000e+00> : vector<8x32xf32>
      %58 = tpu.matmul %56, %57, %cst_44 {dimension_numbers = #tpu.dot_dimension_numbers<[1], [0], [0], [1], [0, 0, 1, 1], [], []>} : vector<8x8xbf16>, vector<8x32xbf16>, vector<8x32xf32> -> vector<8x32xf32>
      %59 = vector.extract_strided_slice %38 {offsets = [0, 32], sizes = [8, 32], strides = [1, 1]} : vector<8x64xf32> to vector<8x32xf32>
      %60 = arith.addf %59, %58 : vector<8x32xf32>
      %c0_45 = arith.constant 0 : index
      %c32_46 = arith.constant 32 : index
      %61 = vector.load %arg11[%c0_45, %c32_46] : memref<8x64xf32, #tpu.memory_space<vmem>>, vector<8x32xf32>
      tpu.vector_store %arg11[%c0_45, %c32_46], %60 {strides = array<i32>} : memref<8x64xf32, #tpu.memory_space<vmem>>, vector<8x32xf32>,
    } else {
    }
    %c0 = arith.constant 0 : index
    %c0_1 = arith.constant 0 : index
    %3 = vector.load %arg5[%c0, %c0_1] : memref<64x32xbf16, #tpu.memory_space<vmem>>, vector<64x32xbf16>
    %c0_2 = arith.constant 0 : index
    %c0_3 = arith.constant 0 : index
    %4 = vector.load %arg7[%c0_2, %c0_3] : memref<32x64xbf16, #tpu.memory_space<vmem>>, vector<32x64xbf16>
    %c0_4 = arith.constant 0 : index
    %c0_5 = arith.constant 0 : index
    %5 = vector.load %arg6[%c0_4, %c0_5] : memref<1x64xf32, #tpu.memory_space<vmem>>, vector<1x64xf32>
    %6 = vector.shape_cast %5 : vector<1x64xf32> to vector<1x64xf32>
    %7 = vector.broadcast %6 : vector<1x64xf32> to vector<8x64xf32>
    %c0_6 = arith.constant 0 : index
    %c0_7 = arith.constant 0 : index
    %8 = vector.load %arg11[%c0_6, %c0_7] : memref<8x64xf32, #tpu.memory_space<vmem>>, vector<8x32xf32>
    %9 = arith.truncf %8 : vector<8x32xf32> to vector<8x32xbf16>
    %cst = arith.constant dense<0.000000e+00> : vector<8x64xf32>
    %10 = tpu.matmul %9, %3, %cst {dimension_numbers = #tpu.dot_dimension_numbers<[1], [1], [0], [0], [0, 0, 1, 0], [], []>} : vector<8x32xbf16>, vector<64x32xbf16>, vector<8x64xf32> -> vector<8x64xf32>
    %11 = arith.addf %10, %7 : vector<8x64xf32>
    %cst_8 = arith.constant 0.000000e+00 : f32
    %12 = vector.broadcast %cst_8 : f32 to vector<8x64xf32>
    %13 = arith.maximumf %11, %12 : vector<8x64xf32>
    %c0_9 = arith.constant 0 : index
    %c0_10 = arith.constant 0 : index
    %14 = vector.load %arg10[%c0_9, %c0_10] : memref<8x64xf32, #tpu.memory_space<vmem>>, vector<8x32xf32>
    %15 = arith.truncf %13 : vector<8x64xf32> to vector<8x64xbf16>
    %cst_11 = arith.constant dense<0.000000e+00> : vector<8x32xf32>
    %16 = tpu.matmul %15, %4, %cst_11 {dimension_numbers = #tpu.dot_dimension_numbers<[1], [1], [0], [0], [0, 0, 1, 0], [], []>} : vector<8x64xbf16>, vector<32x64xbf16>, vector<8x32xf32> -> vector<8x32xf32>
    %17 = arith.addf %14, %16 : vector<8x32xf32>
    %c0_12 = arith.constant 0 : index
    %c0_13 = arith.constant 0 : index
    %18 = vector.load %arg10[%c0_12, %c0_13] : memref<8x64xf32, #tpu.memory_space<vmem>>, vector<8x32xf32>
    tpu.vector_store %arg10[%c0_12, %c0_13], %17 {strides = array<i32>} : memref<8x64xf32, #tpu.memory_space<vmem>>, vector<8x32xf32>,
    %c0_14 = arith.constant 0 : index
    %c32 = arith.constant 32 : index
    %19 = vector.load %arg11[%c0_14, %c32] : memref<8x64xf32, #tpu.memory_space<vmem>>, vector<8x32xf32>
    %20 = arith.truncf %19 : vector<8x32xf32> to vector<8x32xbf16>
    %cst_15 = arith.constant dense<0.000000e+00> : vector<8x64xf32>
    %21 = tpu.matmul %20, %3, %cst_15 {dimension_numbers = #tpu.dot_dimension_numbers<[1], [1], [0], [0], [0, 0, 1, 0], [], []>} : vector<8x32xbf16>, vector<64x32xbf16>, vector<8x64xf32> -> vector<8x64xf32>
    %22 = arith.addf %21, %7 : vector<8x64xf32>
    %cst_16 = arith.constant 0.000000e+00 : f32
    %23 = vector.broadcast %cst_16 : f32 to vector<8x64xf32>
    %24 = arith.maximumf %22, %23 : vector<8x64xf32>
    %c0_17 = arith.constant 0 : index
    %c32_18 = arith.constant 32 : index
    %25 = vector.load %arg10[%c0_17, %c32_18] : memref<8x64xf32, #tpu.memory_space<vmem>>, vector<8x32xf32>
    %26 = arith.truncf %24 : vector<8x64xf32> to vector<8x64xbf16>
    %cst_19 = arith.constant dense<0.000000e+00> : vector<8x32xf32>
    %27 = tpu.matmul %26, %4, %cst_19 {dimension_numbers = #tpu.dot_dimension_numbers<[1], [1], [0], [0], [0, 0, 1, 0], [], []>} : vector<8x64xbf16>, vector<32x64xbf16>, vector<8x32xf32> -> vector<8x32xf32>
    %28 = arith.addf %25, %27 : vector<8x32xf32>
    %c0_20 = arith.constant 0 : index
    %c32_21 = arith.constant 32 : index
    %29 = vector.load %arg10[%c0_20, %c32_21] : memref<8x64xf32, #tpu.memory_space<vmem>>, vector<8x32xf32>
    tpu.vector_store %arg10[%c0_20, %c32_21], %28 {strides = array<i32>} : memref<8x64xf32, #tpu.memory_space<vmem>>, vector<8x32xf32>,
    %c0_i32_22 = arith.constant 0 : i32
    %30 = arith.cmpi eq, %arg1, %c0_i32_22 : i32
    %31 = arith.extui %30 : i1 to i32
    %c0_i32_23 = arith.constant 0 : i32
    %32 = arith.cmpi ne, %31, %c0_i32_23 : i32
    scf.if %32 {
      %c0_24 = arith.constant 0 : index
      %c0_25 = arith.constant 0 : index
      %33 = vector.load %arg11[%c0_24, %c0_25] : memref<8x64xf32, #tpu.memory_space<vmem>>, vector<8x64xf32>
      %c0_26 = arith.constant 0 : index
      %c0_27 = arith.constant 0 : index
      %34 = vector.load %arg10[%c0_26, %c0_27] : memref<8x64xf32, #tpu.memory_space<vmem>>, vector<8x64xf32>
      %35 = arith.addf %33, %34 : vector<8x64xf32>
      %c0_28 = arith.constant 0 : index
      %c0_29 = arith.constant 0 : index
      %36 = vector.load %arg8[%c0_28, %c0_29] : memref<1x64xf32, #tpu.memory_space<vmem>>, vector<1x64xf32>
      %37 = vector.broadcast %36 : vector<1x64xf32> to vector<8x64xf32>
      %38 = arith.addf %35, %37 : vector<8x64xf32>
      %c0_30 = arith.constant 0 : index
      %c0_31 = arith.constant 0 : index
      %39 = vector.load %arg9[%c0_30, %c0_31] : memref<8x64xf32, #tpu.memory_space<vmem>>, vector<8x64xf32>
      tpu.vector_store %arg9[%c0_30, %c0_31], %38 {strides = array<i32>} : memref<8x64xf32, #tpu.memory_space<vmem>>, vector<8x64xf32>,
    } else {
    }
    return
  }
  func.func @transform_0(%arg0: i32, %arg1: i32) -> (i32, i32) {
    %c0_i32 = arith.constant 0 : i32
    %c0_i32_0 = arith.constant 0 : i32
    %c0_i32_1 = arith.constant 0 : i32
    return %c0_i32, %c0_i32_0 : i32, i32
  }
  func.func @transform_1(%arg0: i32, %arg1: i32) -> (i32, i32, i32) {
    %c0_i32 = arith.constant 0 : i32
    %c0_i32_0 = arith.constant 0 : i32
    %c0_i32_1 = arith.constant 0 : i32
    return %c0_i32, %arg0, %c0_i32_0 : i32, i32, i32
  }
  func.func @transform_2(%arg0: i32, %arg1: i32) -> (i32, i32) {
    %c0_i32 = arith.constant 0 : i32
    %c0_i32_0 = arith.constant 0 : i32
    %c0_i32_1 = arith.constant 0 : i32
    return %c0_i32, %c0_i32_0 : i32, i32
  }
  func.func @transform_3(%arg0: i32, %arg1: i32) -> (i32, i32) {
    %c0_i32 = arith.constant 0 : i32
    %c0_i32_0 = arith.constant 0 : i32
    return %arg1, %c0_i32 : i32, i32
  }
  func.func @transform_4(%arg0: i32, %arg1: i32) -> (i32, i32) {
    %c0_i32 = arith.constant 0 : i32
    %c0_i32_0 = arith.constant 0 : i32
    return %c0_i32, %arg1 : i32, i32
  }
  func.func @transform_5(%arg0: i32, %arg1: i32) -> (i32, i32) {
    %c0_i32 = arith.constant 0 : i32
    %c0_i32_0 = arith.constant 0 : i32
    return %c0_i32, %arg1 : i32, i32
  }
  func.func @transform_6(%arg0: i32, %arg1: i32) -> (i32, i32) {
    %c0_i32 = arith.constant 0 : i32
    %c0_i32_0 = arith.constant 0 : i32
    %c0_i32_1 = arith.constant 0 : i32
    return %c0_i32, %c0_i32_0 : i32, i32
  }
  func.func @transform_7(%arg0: i32, %arg1: i32) -> (i32, i32) {
    %c0_i32 = arith.constant 0 : i32
    %c0_i32_0 = arith.constant 0 : i32
    return %arg0, %c0_i32 : i32, i32
  }
}

</mosaic_0001>

<llo_original>
// kernel: tile.8
$region0: #{tile.8}
  #allocation0 [shape = 's32[1]{0}', space=sflag, size = 0x4, scoped, tag = 'scoped memory for tile.8']
  %s0 = inlined_call_operand.vmem [shape: f32[32], index: 0, kind: input, shape index: {}]
  %s1 = inlined_call_operand.vmem [shape: f32[2,32], index: 1, kind: output, shape index: {}]
  // Predicated region
  $region2: #{tile.8} parent=0 // pred_check
    _
  $region3: #{tile.8} parent=0 // pred_check_branch
    %3 = sbr.rel (0) target = $region5
  $region4: #{tile.8} parent=0 // pred_region
    _
  $region5: #{tile.8} parent=0 // pred_fallthru
    _
  %v4 = vld [vmem:[%s0] ss:$0 sm:$0xff]
  %5 = vst [vmem:[%s1] sm:$0x3] %v4

// kernel: tile.9
$region0: #{tile.9}
  %s0 = inlined_call_operand.vmem [shape: f32[2,32], index: 0, kind: input, shape index: {}]
  %s1 = inlined_call_operand.vmem [shape: f32[1,64], index: 1, kind: output, shape index: {}]
  $region1: #{tile.9} parent=0
    #allocation0 [shape = 'u8[4096]{0}', space=vmem, size = 0x1000, scoped, tag = 'scoped mem for output reshape']
    #allocation1 [shape = 'u8[4096]{0}', space=vmem, size = 0x1000, scoped, tag = 'scoped mem for input reshape']
    %s3 = sshllo.u32 0, 2
    %v4 = vld [vmem:[%s0] sm:%s3]
    %5 = vst [vmem:[#allocation1] sm:%s3] %v4
    %v6 = vld [vmem:[#allocation1] sm:$0x1]
    %vm7 = vcmask 261120
    %8 = vst.msk [vmem:[#allocation0] sm:$0x1] %vm7, %v6
    %s9 = scalar_lea.vmem [#allocation1], 1
    %v10 = vld [vmem:[%s9] sm:$0x1]
    %11 = vrot.lane.b32.xlu0 %v10, 32
    %v12 = vpop.permute.xlu0 %11
    %vm13 = vcmask 523520
    %14 = vst.msk [vmem:[#allocation0] sm:$0x1] %vm13, %v12
    %s16 = sshllo.u32 0, 1
    %v18 = vld [vmem:[#allocation0] sm:%s16]
    %s19 = sshllo.u32 0, 1
    %20 = vst [vmem:[%s1] sm:%s19] %v18

// kernel: manual_transformer_layer.1
$region0: #{manual_transformer_layer.1}
  #allocation0 [shape = 'u32[]', space=smem, size = 0x4, offset = 0x4, fixed_abs, tag = 'smem constant byte address 0x4 - core index']
  #allocation1 [shape = 'u32[144,128]{1,0:T(1,128)}', space=vmem, size = 0x12000, scoped, tag = 'internal scratch']
  #allocation2 [shape = 'f32[8,64]{1,0:T(8,128)}', space=vmem, size = 0x1000, scoped, tag = 'scratch operand']
  #allocation3 [shape = 'f32[8,64]{1,0:T(8,128)}', space=vmem, size = 0x1000, scoped, tag = 'scratch operand']
  %s0 = inlined_call_operand.vmem [shape: f32[8,64], index: 0, kind: input, shape index: {}]
  %s1 = inlined_call_operand.vmem [shape: f32[2,8,8], index: 1, kind: input, shape index: {}]
  %s2 = inlined_call_operand.vmem [shape: bf16[32,32], index: 2, kind: input, shape index: {}]
  %s3 = inlined_call_operand.vmem [shape: bf16[64,32], index: 3, kind: input, shape index: {}]
  %s4 = inlined_call_operand.vmem [shape: f32[1,64], index: 4, kind: input, shape index: {}]
  %s5 = inlined_call_operand.vmem [shape: bf16[32,64], index: 5, kind: input, shape index: {}]
  %s6 = inlined_call_operand.vmem [shape: f32[1,64], index: 6, kind: input, shape index: {}]
  %s7 = inlined_call_operand.vmem [shape: f32[8,64], index: 7, kind: output, shape index: {}]
  %s8 = sld [smem:[#allocation0]]
  $region46: #{manual_transformer_layer.1} parent=0
    _
  %s10 = ssub.s32 1, %s8
  %s11 = scalar_select 0, %s10, %s8
  // Predicated region
  $region2: #{manual_transformer_layer.1} parent=0 // pred_check
    _
  $region3: #{manual_transformer_layer.1} parent=0 // pred_check_branch
    %13 = sbr.rel (0) target = $region5
  $region4: #{manual_transformer_layer.1} parent=0 // pred_region
    _
  $region5: #{manual_transformer_layer.1} parent=0 // pred_fallthru
    _
  // Predicated region
  $region6: #{manual_transformer_layer.1} parent=0 // pred_check
    _
  $region7: #{manual_transformer_layer.1} parent=0 // pred_check_branch
    %15 = sbr.rel (0) target = $region9
  $region8: #{manual_transformer_layer.1} parent=0 // pred_region
    _
  $region9: #{manual_transformer_layer.1} parent=0 // pred_fallthru
    _
  // Predicated region
  $region10: #{manual_transformer_layer.1} parent=0 // pred_check
    _
  $region11: #{manual_transformer_layer.1} parent=0 // pred_check_branch
    %17 = sbr.rel (0) target = $region13
  $region12: #{manual_transformer_layer.1} parent=0 // pred_region
    _
  $region13: #{manual_transformer_layer.1} parent=0 // pred_fallthru
    _
  // Predicated region
  $region14: #{manual_transformer_layer.1} parent=0 // pred_check
    _
  $region15: #{manual_transformer_layer.1} parent=0 // pred_check_branch
    %19 = sbr.rel (0) target = $region17
  $region16: #{manual_transformer_layer.1} parent=0 // pred_region
    _
  $region17: #{manual_transformer_layer.1} parent=0 // pred_fallthru
    _
  // Predicated region
  $region18: #{manual_transformer_layer.1} parent=0 // pred_check
    _
  $region19: #{manual_transformer_layer.1} parent=0 // pred_check_branch
    %21 = sbr.rel (0) target = $region21
  $region20: #{manual_transformer_layer.1} parent=0 // pred_region
    _
  $region21: #{manual_transformer_layer.1} parent=0 // pred_fallthru
    _
  // Predicated region
  $region22: #{manual_transformer_layer.1} parent=0 // pred_check
    _
  $region23: #{manual_transformer_layer.1} parent=0 // pred_check_branch
    %23 = sbr.rel (0) target = $region25
  $region24: #{manual_transformer_layer.1} parent=0 // pred_region
    _
  $region25: #{manual_transformer_layer.1} parent=0 // pred_fallthru
    _
  // Predicated region
  $region26: #{manual_transformer_layer.1} parent=0 // pred_check
    _
  $region27: #{manual_transformer_layer.1} parent=0 // pred_check_branch
    %25 = sbr.rel (0) target = $region29
  $region28: #{manual_transformer_layer.1} parent=0 // pred_region
    _
  $region29: #{manual_transformer_layer.1} parent=0 // pred_fallthru
    _
  %p27 = scmp.eq.s32.totalorder 0, 0
  // Predicated region
  $region30: #{manual_transformer_layer.1} parent=0 // pred_check
    %p28 = pneg %p27
  $region31: #{manual_transformer_layer.1} parent=0 // pred_check_branch
    %30 = sbr.rel (%p28) target = $region33
  $region32: #{manual_transformer_layer.1} parent=0 // pred_region
    %vm31 = vcmask 523264
    %32 = vst.msk [vmem:[#allocation2] sm:$0xff] %vm31, 0.0
    %s33 = smul.u32 0, 8
    %s34 = scalar_lea.vmem %s0, %s33
    %v35 = vld [vmem:[%s34] sm:$0xff]
    %v36 = vld [vmem:[%s2] sm:$0xf]
    %v37 = vld [vmem:[%s2 + $0x4] sm:$0xf]
    %v38 = vld [vmem:[%s2 + $0x8] sm:$0xf]
    %v39 = vld [vmem:[%s2 + $0xc] sm:$0xf]
    %v40 = vld [vmem:[%s0] sm:$0xff]
    %v41 = vpack.c.bf16 %v40, %v40
    %v46 = vunpack.c.l.b16 %v36
    %v47 = vunpack.c.l.b16 %v37
    %v48 = vunpack.c.l.b16 %v38
    %v49 = vunpack.c.l.b16 %v39
    %v50 = vpack.c.b16 %v47, %v46
    %v51 = vpack.c.b16 %v49, %v48
    %vm52 = vcmask 261120
    %v54 = vsel %vm52, %v41, 0
    %v57 = vsel %vm52, %v50, 0
    %v60 = vsel %vm52, %v51, 0
    %62 = vmatprep.subr.bf16.mxu0 0
    %63 = vmatpush1.bf16.xpose.msra.mxu0 %v57
    %64 = vmatprep.subr.bf16.mxu0 0
    %65 = vmatpush1.bf16.xpose.msra.mxu0 %v60
    %66 = vmatprep.subr.bf16.mxu0 0
    %67 = vmatpush1.bf16.xpose.msra.mxu0 0
    %68 = vmatprep.subr.bf16.mxu0 0
    %69 = vmatpush1.bf16.xpose.msra.mxu0 0
    %70 = vmatprep.subr.bf16.mxu0 0
    %71 = vmatpush1.bf16.xpose.msra.mxu0 0
    %72 = vmatprep.subr.bf16.mxu0 0
    %73 = vmatpush1.bf16.xpose.msra.mxu0 0
    %74 = vmatprep.subr.bf16.mxu0 0
    %75 = vmatpush1.bf16.xpose.msra.mxu0 0
    %76 = vmatprep.subr.bf16.mxu0 0
    %77 = vmatpush1.bf16.xpose.msra.mxu0 0
    %78 = vmatprep.subr.bf16.mxu0 0
    %79 = vmatpush1.bf16.xpose.msra.mxu0 0
    %80 = vmatprep.subr.bf16.mxu0 0
    %81 = vmatpush1.bf16.xpose.msra.mxu0 0
    %82 = vmatprep.subr.bf16.mxu0 0
    %83 = vmatpush1.bf16.xpose.msra.mxu0 0
    %84 = vmatprep.subr.bf16.mxu0 0
    %85 = vmatpush1.bf16.xpose.msra.mxu0 0
    %86 = vmatprep.subr.bf16.mxu0 0
    %87 = vmatpush1.bf16.xpose.msra.mxu0 0
    %88 = vmatprep.subr.bf16.mxu0 0
    %89 = vmatpush1.bf16.xpose.msra.mxu0 0
    %90 = vmatprep.subr.bf16.mxu0 0
    %91 = vmatpush1.bf16.xpose.msra.mxu0 0
    %92 = vmatprep.subr.bf16.mxu0 0
    %93 = vmatpush1.bf16.xpose.msra.mxu0 0
    %94 = vmatprep.mubr.bf16.mxu0 0
    %95 = vmatmul.mubr.bf16.gmra.mrb[0].mxu0 %v54
    %v96 = vpop.f32.mrb[0].mxu0
    %v97 = vadd.f32 0.0, %v96
    %v98 = vpop.f32.mrb[0].mxu0
    %v99 = vpop.f32.mrb[0].mxu0
    %v100 = vpop.f32.mrb[0].mxu0
    %101 = vdwg.mxu0
    %v102 = vld [vmem:[%s1] sm:$0xff]
    %v103 = vpack.c.bf16 %v102, %v102
    %v104 = vpack.c.bf16 %v97, %v97
    %vm105 = vcmask 64512
    %v107 = vsel %vm105, %v103, 0
    %vm109 = vcmask 1043456
    %v111 = vsel %vm109, %v104, 0
    %113 = vmatprep.subr.bf16.mxu0 0
    %114 = vmatpush1.bf16.msra.mxu0 %v111
    %115 = vmatprep.subr.bf16.mxu0 0
    %116 = vmatpush1.bf16.msra.mxu0 0
    %117 = vmatprep.subr.bf16.mxu0 0
    %118 = vmatpush1.bf16.msra.mxu0 0
    %119 = vmatprep.subr.bf16.mxu0 0
    %120 = vmatpush1.bf16.msra.mxu0 0
    %121 = vmatprep.subr.bf16.mxu0 0
    %122 = vmatpush1.bf16.msra.mxu0 0
    %123 = vmatprep.subr.bf16.mxu0 0
    %124 = vmatpush1.bf16.msra.mxu0 0
    %125 = vmatprep.subr.bf16.mxu0 0
    %126 = vmatpush1.bf16.msra.mxu0 0
    %127 = vmatprep.subr.bf16.mxu0 0
    %128 = vmatpush1.bf16.msra.mxu0 0
    %129 = vmatprep.subr.bf16.mxu0 0
    %130 = vmatpush1.bf16.msra.mxu0 0
    %131 = vmatprep.subr.bf16.mxu0 0
    %132 = vmatpush1.bf16.msra.mxu0 0
    %133 = vmatprep.subr.bf16.mxu0 0
    %134 = vmatpush1.bf16.msra.mxu0 0
    %135 = vmatprep.subr.bf16.mxu0 0
    %136 = vmatpush1.bf16.msra.mxu0 0
    %137 = vmatprep.subr.bf16.mxu0 0
    %138 = vmatpush1.bf16.msra.mxu0 0
    %139 = vmatprep.subr.bf16.mxu0 0
    %140 = vmatpush1.bf16.msra.mxu0 0
    %141 = vmatprep.subr.bf16.mxu0 0
    %142 = vmatpush1.bf16.msra.mxu0 0
    %143 = vmatprep.subr.bf16.mxu0 0
    %144 = vmatpush1.bf16.msra.mxu0 0
    %145 = vmatprep.mubr.bf16.mxu0 0
    %146 = vmatmul.mubr.bf16.gmra.mrb[0].mxu0 %v107
    %v147 = vpop.f32.mrb[0].mxu0
    %v148 = vadd.f32 0.0, %v147
    %v149 = vpop.f32.mrb[0].mxu0
    %v150 = vpop.f32.mrb[0].mxu0
    %v151 = vpop.f32.mrb[0].mxu0
    %152 = vdwg.mxu0
    %v153 = vadd.f32 %v35, %v148
    %154 = vst.msk [vmem:[#allocation3] sm:$0xff] %vm52, %v153
    %v155 = vld [vmem:[%s0] sm:$0xff]
    %v156 = vpack.c.bf16 %v155, %v155
    %158 = vrot.lane.b32.xlu0 %v156, 96
    %v159 = vpop.permute.xlu0 %158
    %v161 = vsel %vm52, %v159, 0
    %163 = vmatprep.subr.bf16.mxu0 0
    %164 = vmatpush1.bf16.xpose.msra.mxu0 %v57
    %165 = vmatprep.subr.bf16.mxu0 0
    %166 = vmatpush1.bf16.xpose.msra.mxu0 %v60
    %167 = vmatprep.subr.bf16.mxu0 0
    %168 = vmatpush1.bf16.xpose.msra.mxu0 0
    %169 = vmatprep.subr.bf16.mxu0 0
    %170 = vmatpush1.bf16.xpose.msra.mxu0 0
    %171 = vmatprep.subr.bf16.mxu0 0
    %172 = vmatpush1.bf16.xpose.msra.mxu0 0
    %173 = vmatprep.subr.bf16.mxu0 0
    %174 = vmatpush1.bf16.xpose.msra.mxu0 0
    %175 = vmatprep.subr.bf16.mxu0 0
    %176 = vmatpush1.bf16.xpose.msra.mxu0 0
    %177 = vmatprep.subr.bf16.mxu0 0
    %178 = vmatpush1.bf16.xpose.msra.mxu0 0
    %179 = vmatprep.subr.bf16.mxu0 0
    %180 = vmatpush1.bf16.xpose.msra.mxu0 0
    %181 = vmatprep.subr.bf16.mxu0 0
    %182 = vmatpush1.bf16.xpose.msra.mxu0 0
    %183 = vmatprep.subr.bf16.mxu0 0
    %184 = vmatpush1.bf16.xpose.msra.mxu0 0
    %185 = vmatprep.subr.bf16.mxu0 0
    %186 = vmatpush1.bf16.xpose.msra.mxu0 0
    %187 = vmatprep.subr.bf16.mxu0 0
    %188 = vmatpush1.bf16.xpose.msra.mxu0 0
    %189 = vmatprep.subr.bf16.mxu0 0
    %190 = vmatpush1.bf16.xpose.msra.mxu0 0
    %191 = vmatprep.subr.bf16.mxu0 0
    %192 = vmatpush1.bf16.xpose.msra.mxu0 0
    %193 = vmatprep.subr.bf16.mxu0 0
    %194 = vmatpush1.bf16.xpose.msra.mxu0 0
    %195 = vmatprep.mubr.bf16.mxu0 0
    %196 = vmatmul.mubr.bf16.gmra.mrb[0].mxu0 %v161
    %v197 = vpop.f32.mrb[0].mxu0
    %v198 = vadd.f32 0.0, %v197
    %v199 = vpop.f32.mrb[0].mxu0
    %v200 = vpop.f32.mrb[0].mxu0
    %v201 = vpop.f32.mrb[0].mxu0
    %202 = vdwg.mxu0
    %s203 = scalar_lea.vmem %s1, 8
    %v204 = vld [vmem:[%s203] sm:$0xff]
    %v205 = vpack.c.bf16 %v204, %v204
    %v206 = vpack.c.bf16 %v198, %v198
    %v208 = vsel %vm105, %v205, 0
    %v211 = vsel %vm109, %v206, 0
    %213 = vmatprep.subr.bf16.mxu0 0
    %214 = vmatpush1.bf16.msra.mxu0 %v211
    %215 = vmatprep.subr.bf16.mxu0 0
    %216 = vmatpush1.bf16.msra.mxu0 0
    %217 = vmatprep.subr.bf16.mxu0 0
    %218 = vmatpush1.bf16.msra.mxu0 0
    %219 = vmatprep.subr.bf16.mxu0 0
    %220 = vmatpush1.bf16.msra.mxu0 0
    %221 = vmatprep.subr.bf16.mxu0 0
    %222 = vmatpush1.bf16.msra.mxu0 0
    %223 = vmatprep.subr.bf16.mxu0 0
    %224 = vmatpush1.bf16.msra.mxu0 0
    %225 = vmatprep.subr.bf16.mxu0 0
    %226 = vmatpush1.bf16.msra.mxu0 0
    %227 = vmatprep.subr.bf16.mxu0 0
    %228 = vmatpush1.bf16.msra.mxu0 0
    %229 = vmatprep.subr.bf16.mxu0 0
    %230 = vmatpush1.bf16.msra.mxu0 0
    %231 = vmatprep.subr.bf16.mxu0 0
    %232 = vmatpush1.bf16.msra.mxu0 0
    %233 = vmatprep.subr.bf16.mxu0 0
    %234 = vmatpush1.bf16.msra.mxu0 0
    %235 = vmatprep.subr.bf16.mxu0 0
    %236 = vmatpush1.bf16.msra.mxu0 0
    %237 = vmatprep.subr.bf16.mxu0 0
    %238 = vmatpush1.bf16.msra.mxu0 0
    %239 = vmatprep.subr.bf16.mxu0 0
    %240 = vmatpush1.bf16.msra.mxu0 0
    %241 = vmatprep.subr.bf16.mxu0 0
    %242 = vmatpush1.bf16.msra.mxu0 0
    %243 = vmatprep.subr.bf16.mxu0 0
    %244 = vmatpush1.bf16.msra.mxu0 0
    %245 = vmatprep.mubr.bf16.mxu0 0
    %246 = vmatmul.mubr.bf16.gmra.mrb[0].mxu0 %v208
    %v247 = vpop.f32.mrb[0].mxu0
    %v248 = vadd.f32 0.0, %v247
    %v249 = vpop.f32.mrb[0].mxu0
    %v250 = vpop.f32.mrb[0].mxu0
    %v251 = vpop.f32.mrb[0].mxu0
    %252 = vdwg.mxu0
    %254 = vrot.lane.b32.xlu0 %v248, 32
    %v255 = vpop.permute.xlu0 %254
    %v257 = vadd.f32 %v35, %v255
    %vm258 = vcmask 523520
    %259 = vst.msk [vmem:[#allocation3] sm:$0xff] %vm258, %v257
  $region33: #{manual_transformer_layer.1} parent=0 // pred_fallthru
    _
  %v260 = vld [vmem:[%s3] sm:$0xf]
  %v261 = vld [vmem:[%s3 + $0x4] sm:$0xf]
  %v262 = vld [vmem:[%s3 + $0x8] sm:$0xf]
  %v263 = vld [vmem:[%s3 + $0xc] sm:$0xf]
  %v264 = vld [vmem:[%s3 + $0x10] sm:$0xf]
  %v265 = vld [vmem:[%s3 + $0x14] sm:$0xf]
  %v266 = vld [vmem:[%s3 + $0x18] sm:$0xf]
  %v267 = vld [vmem:[%s3 + $0x1c] sm:$0xf]
  %v268 = vld [vmem:[%s5] sm:$0xf]
  %v269 = vld [vmem:[%s5 + $0x4] sm:$0xf]
  %v270 = vld [vmem:[%s5 + $0x8] sm:$0xf]
  %v271 = vld [vmem:[%s5 + $0xc] sm:$0xf]
  %v272 = vld [vmem:[%s4] sm:$0x1]
  %v274 = vlaneseq
  %v275 = vshrl.u32 %v274, 7
  %v276 = vsub.s32 0, %v275
  %v277 = vrot.slane %v272, %v276
  %v279 = vld [vmem:[#allocation3] sm:$0xff]
  %v280 = vpack.c.bf16 %v279, %v279
  %v289 = vunpack.c.l.b16 %v260
  %v290 = vunpack.c.l.b16 %v261
  %v291 = vunpack.c.l.b16 %v262
  %v292 = vunpack.c.l.b16 %v263
  %v293 = vunpack.c.l.b16 %v264
  %v294 = vunpack.c.l.b16 %v265
  %v295 = vunpack.c.l.b16 %v266
  %v296 = vunpack.c.l.b16 %v267
  %v297 = vpack.c.b16 %v290, %v289
  %v298 = vpack.c.b16 %v292, %v291
  %v299 = vpack.c.b16 %v294, %v293
  %v300 = vpack.c.b16 %v296, %v295
  %vm301 = vcmask 261120
  %v303 = vsel %vm301, %v280, 0
  %v306 = vsel %vm301, %v297, 0
  %v309 = vsel %vm301, %v298, 0
  %v312 = vsel %vm301, %v299, 0
  %v315 = vsel %vm301, %v300, 0
  %317 = vmatprep.subr.bf16.mxu0 0
  %318 = vmatpush1.bf16.xpose.msra.mxu0 %v306
  %319 = vmatprep.subr.bf16.mxu0 0
  %320 = vmatpush1.bf16.xpose.msra.mxu0 %v309
  %321 = vmatprep.subr.bf16.mxu0 0
  %322 = vmatpush1.bf16.xpose.msra.mxu0 %v312
  %323 = vmatprep.subr.bf16.mxu0 0
  %324 = vmatpush1.bf16.xpose.msra.mxu0 %v315
  %325 = vmatprep.subr.bf16.mxu0 0
  %326 = vmatpush1.bf16.xpose.msra.mxu0 0
  %327 = vmatprep.subr.bf16.mxu0 0
  %328 = vmatpush1.bf16.xpose.msra.mxu0 0
  %329 = vmatprep.subr.bf16.mxu0 0
  %330 = vmatpush1.bf16.xpose.msra.mxu0 0
  %331 = vmatprep.subr.bf16.mxu0 0
  %332 = vmatpush1.bf16.xpose.msra.mxu0 0
  %333 = vmatprep.subr.bf16.mxu0 0
  %334 = vmatpush1.bf16.xpose.msra.mxu0 0
  %335 = vmatprep.subr.bf16.mxu0 0
  %336 = vmatpush1.bf16.xpose.msra.mxu0 0
  %337 = vmatprep.subr.bf16.mxu0 0
  %338 = vmatpush1.bf16.xpose.msra.mxu0 0
  %339 = vmatprep.subr.bf16.mxu0 0
  %340 = vmatpush1.bf16.xpose.msra.mxu0 0
  %341 = vmatprep.subr.bf16.mxu0 0
  %342 = vmatpush1.bf16.xpose.msra.mxu0 0
  %343 = vmatprep.subr.bf16.mxu0 0
  %344 = vmatpush1.bf16.xpose.msra.mxu0 0
  %345 = vmatprep.subr.bf16.mxu0 0
  %346 = vmatpush1.bf16.xpose.msra.mxu0 0
  %347 = vmatprep.subr.bf16.mxu0 0
  %348 = vmatpush1.bf16.xpose.msra.mxu0 0
  %349 = vmatprep.mubr.bf16.mxu0 0
  %350 = vmatmul.mubr.bf16.gmra.mrb[0].mxu0 %v303
  %v351 = vpop.f32.mrb[0].mxu0
  %v352 = vadd.f32 %v277, %v351
  %v353 = vpop.f32.mrb[0].mxu0
  %v354 = vpop.f32.mrb[0].mxu0
  %v355 = vpop.f32.mrb[0].mxu0
  %356 = vdwg.mxu0
  %v357 = vmax.f32 %v352, 0.0
  %v358 = vld [vmem:[#allocation2] sm:$0xff]
  %v359 = vpack.c.bf16 %v357, %v357
  %v364 = vunpack.c.l.b16 %v268
  %v365 = vunpack.c.l.b16 %v269
  %v366 = vunpack.c.l.b16 %v270
  %v367 = vunpack.c.l.b16 %v271
  %v368 = vpack.c.b16 %v365, %v364
  %v369 = vpack.c.b16 %v367, %v366
  %vm370 = vcmask 523264
  %v372 = vsel %vm370, %v359, 0
  %v375 = vsel %vm370, %v368, 0
  %v378 = vsel %vm370, %v369, 0
  %380 = vmatprep.subr.bf16.mxu0 0
  %381 = vmatpush1.bf16.xpose.msra.mxu0 %v375
  %382 = vmatprep.subr.bf16.mxu0 0
  %383 = vmatpush1.bf16.xpose.msra.mxu0 %v378
  %384 = vmatprep.subr.bf16.mxu0 0
  %385 = vmatpush1.bf16.xpose.msra.mxu0 0
  %386 = vmatprep.subr.bf16.mxu0 0
  %387 = vmatpush1.bf16.xpose.msra.mxu0 0
  %388 = vmatprep.subr.bf16.mxu0 0
  %389 = vmatpush1.bf16.xpose.msra.mxu0 0
  %390 = vmatprep.subr.bf16.mxu0 0
  %391 = vmatpush1.bf16.xpose.msra.mxu0 0
  %392 = vmatprep.subr.bf16.mxu0 0
  %393 = vmatpush1.bf16.xpose.msra.mxu0 0
  %394 = vmatprep.subr.bf16.mxu0 0
  %395 = vmatpush1.bf16.xpose.msra.mxu0 0
  %396 = vmatprep.subr.bf16.mxu0 0
  %397 = vmatpush1.bf16.xpose.msra.mxu0 0
  %398 = vmatprep.subr.bf16.mxu0 0
  %399 = vmatpush1.bf16.xpose.msra.mxu0 0
  %400 = vmatprep.subr.bf16.mxu0 0
  %401 = vmatpush1.bf16.xpose.msra.mxu0 0
  %402 = vmatprep.subr.bf16.mxu0 0
  %403 = vmatpush1.bf16.xpose.msra.mxu0 0
  %404 = vmatprep.subr.bf16.mxu0 0
  %405 = vmatpush1.bf16.xpose.msra.mxu0 0
  %406 = vmatprep.subr.bf16.mxu0 0
  %407 = vmatpush1.bf16.xpose.msra.mxu0 0
  %408 = vmatprep.subr.bf16.mxu0 0
  %409 = vmatpush1.bf16.xpose.msra.mxu0 0
  %410 = vmatprep.subr.bf16.mxu0 0
  %411 = vmatpush1.bf16.xpose.msra.mxu0 0
  %412 = vmatprep.mubr.bf16.mxu0 0
  %413 = vmatmul.mubr.bf16.gmra.mrb[0].mxu0 %v372
  %v414 = vpop.f32.mrb[0].mxu0
  %v415 = vadd.f32 0.0, %v414
  %v416 = vpop.f32.mrb[0].mxu0
  %v417 = vpop.f32.mrb[0].mxu0
  %v418 = vpop.f32.mrb[0].mxu0
  %419 = vdwg.mxu0
  %v420 = vadd.f32 %v358, %v415
  %421 = vst.msk [vmem:[#allocation2] sm:$0xff] %vm301, %v420
  %v422 = vld [vmem:[#allocation3] sm:$0xff]
  %v423 = vpack.c.bf16 %v422, %v422
  %425 = vrot.lane.b32.xlu0 %v423, 96
  %v426 = vpop.permute.xlu0 %425
  %v428 = vsel %vm301, %v426, 0
  %430 = vmatprep.subr.bf16.mxu0 0
  %431 = vmatpush1.bf16.xpose.msra.mxu0 %v306
  %432 = vmatprep.subr.bf16.mxu0 0
  %433 = vmatpush1.bf16.xpose.msra.mxu0 %v309
  %434 = vmatprep.subr.bf16.mxu0 0
  %435 = vmatpush1.bf16.xpose.msra.mxu0 %v312
  %436 = vmatprep.subr.bf16.mxu0 0
  %437 = vmatpush1.bf16.xpose.msra.mxu0 %v315
  %438 = vmatprep.subr.bf16.mxu0 0
  %439 = vmatpush1.bf16.xpose.msra.mxu0 0
  %440 = vmatprep.subr.bf16.mxu0 0
  %441 = vmatpush1.bf16.xpose.msra.mxu0 0
  %442 = vmatprep.subr.bf16.mxu0 0
  %443 = vmatpush1.bf16.xpose.msra.mxu0 0
  %444 = vmatprep.subr.bf16.mxu0 0
  %445 = vmatpush1.bf16.xpose.msra.mxu0 0
  %446 = vmatprep.subr.bf16.mxu0 0
  %447 = vmatpush1.bf16.xpose.msra.mxu0 0
  %448 = vmatprep.subr.bf16.mxu0 0
  %449 = vmatpush1.bf16.xpose.msra.mxu0 0
  %450 = vmatprep.subr.bf16.mxu0 0
  %451 = vmatpush1.bf16.xpose.msra.mxu0 0
  %452 = vmatprep.subr.bf16.mxu0 0
  %453 = vmatpush1.bf16.xpose.msra.mxu0 0
  %454 = vmatprep.subr.bf16.mxu0 0
  %455 = vmatpush1.bf16.xpose.msra.mxu0 0
  %456 = vmatprep.subr.bf16.mxu0 0
  %457 = vmatpush1.bf16.xpose.msra.mxu0 0
  %458 = vmatprep.subr.bf16.mxu0 0
  %459 = vmatpush1.bf16.xpose.msra.mxu0 0
  %460 = vmatprep.subr.bf16.mxu0 0
  %461 = vmatpush1.bf16.xpose.msra.mxu0 0
  %462 = vmatprep.mubr.bf16.mxu0 0
  %463 = vmatmul.mubr.bf16.gmra.mrb[0].mxu0 %v428
  %v464 = vpop.f32.mrb[0].mxu0
  %v465 = vadd.f32 %v277, %v464
  %v466 = vpop.f32.mrb[0].mxu0
  %v467 = vpop.f32.mrb[0].mxu0
  %v468 = vpop.f32.mrb[0].mxu0
  %469 = vdwg.mxu0
  %v470 = vmax.f32 %v465, 0.0
  %v471 = vld [vmem:[#allocation2] sm:$0xff]
  %v472 = vpack.c.bf16 %v470, %v470
  %v474 = vsel %vm370, %v472, 0
  %476 = vmatprep.subr.bf16.mxu0 0
  %477 = vmatpush1.bf16.xpose.msra.mxu0 %v375
  %478 = vmatprep.subr.bf16.mxu0 0
  %479 = vmatpush1.bf16.xpose.msra.mxu0 %v378
  %480 = vmatprep.subr.bf16.mxu0 0
  %481 = vmatpush1.bf16.xpose.msra.mxu0 0
  %482 = vmatprep.subr.bf16.mxu0 0
  %483 = vmatpush1.bf16.xpose.msra.mxu0 0
  %484 = vmatprep.subr.bf16.mxu0 0
  %485 = vmatpush1.bf16.xpose.msra.mxu0 0
  %486 = vmatprep.subr.bf16.mxu0 0
  %487 = vmatpush1.bf16.xpose.msra.mxu0 0
  %488 = vmatprep.subr.bf16.mxu0 0
  %489 = vmatpush1.bf16.xpose.msra.mxu0 0
  %490 = vmatprep.subr.bf16.mxu0 0
  %491 = vmatpush1.bf16.xpose.msra.mxu0 0
  %492 = vmatprep.subr.bf16.mxu0 0
  %493 = vmatpush1.bf16.xpose.msra.mxu0 0
  %494 = vmatprep.subr.bf16.mxu0 0
  %495 = vmatpush1.bf16.xpose.msra.mxu0 0
  %496 = vmatprep.subr.bf16.mxu0 0
  %497 = vmatpush1.bf16.xpose.msra.mxu0 0
  %498 = vmatprep.subr.bf16.mxu0 0
  %499 = vmatpush1.bf16.xpose.msra.mxu0 0
  %500 = vmatprep.subr.bf16.mxu0 0
  %501 = vmatpush1.bf16.xpose.msra.mxu0 0
  %502 = vmatprep.subr.bf16.mxu0 0
  %503 = vmatpush1.bf16.xpose.msra.mxu0 0
  %504 = vmatprep.subr.bf16.mxu0 0
  %505 = vmatpush1.bf16.xpose.msra.mxu0 0
  %506 = vmatprep.subr.bf16.mxu0 0
  %507 = vmatpush1.bf16.xpose.msra.mxu0 0
  %508 = vmatprep.mubr.bf16.mxu0 0
  %509 = vmatmul.mubr.bf16.gmra.mrb[0].mxu0 %v474
  %v510 = vpop.f32.mrb[0].mxu0
  %v511 = vadd.f32 0.0, %v510
  %v512 = vpop.f32.mrb[0].mxu0
  %v513 = vpop.f32.mrb[0].mxu0
  %v514 = vpop.f32.mrb[0].mxu0
  %515 = vdwg.mxu0
  %517 = vrot.lane.b32.xlu0 %v511, 32
  %v518 = vpop.permute.xlu0 %517
  %v520 = vadd.f32 %v471, %v518
  %vm521 = vcmask 523520
  %522 = vst.msk [vmem:[#allocation2] sm:$0xff] %vm521, %v520
  // Predicated region
  $region34: #{manual_transformer_layer.1} parent=0 // pred_check
    %p523 = pneg %p27
  $region35: #{manual_transformer_layer.1} parent=0 // pred_check_branch
    %525 = sbr.rel (%p523) target = $region37
  $region36: #{manual_transformer_layer.1} parent=0 // pred_region
    %v526 = vld [vmem:[#allocation3] sm:$0xff]
    %v527 = vld [vmem:[#allocation2] sm:$0xff]
    %v528 = vadd.f32 %v526, %v527
    %v529 = vld [vmem:[%s6] sm:$0x1]
    %v531 = vlaneseq
    %v532 = vshrl.u32 %v531, 7
    %v533 = vsub.s32 0, %v532
    %v534 = vrot.slane %v529, %v533
    %v536 = vadd.f32 %v528, %v534
    %537 = vst.msk [vmem:[%s7] sm:$0xff] %vm370, %v536
  $region37: #{manual_transformer_layer.1} parent=0 // pred_fallthru
    _
  // Predicated region
  $region38: #{manual_transformer_layer.1} parent=0 // pred_check
    _
  $region39: #{manual_transformer_layer.1} parent=0 // pred_check_branch
    %539 = sbr.rel (0) target = $region41
  $region40: #{manual_transformer_layer.1} parent=0 // pred_region
    _
  $region41: #{manual_transformer_layer.1} parent=0 // pred_fallthru
    _
  // Predicated region
  $region42: #{manual_transformer_layer.1} parent=0 // pred_check
    _
  $region43: #{manual_transformer_layer.1} parent=0 // pred_check_branch
    %541 = sbr.rel (0) target = $region45
  $region44: #{manual_transformer_layer.1} parent=0 // pred_region
    _
  $region45: #{manual_transformer_layer.1} parent=0 // pred_fallthru
    _

</llo_original>
